<compile_context>
chip_gen: v5e
topology: v5e:2x2
jax: 0.10.0
libtpu: 0.0.40
codegen_flags: <defaults>
</compile_context>

<pallas_src>
import functools

import jax
import jax.numpy as jnp
from jax.experimental import pallas as pl
from jax.experimental.pallas import tpu as pltpu


# ------------------------------ Pallas kernel ------------------------------- #

def _bottleneck_kernel(x_ref, m1_ref, b1_ref, m2_ref, b2_ref, mdn_ref, mup_ref,
                       o_ref, *, add):
    # x_ref : (R, P*W*C1)   R = Bblk*H rows, images packed (p, w, c) on lanes
    # mK_ref: (3, P*W*Cin, P*W*Cout) bf16 banded weights (BN scale folded in)
    # bK_ref: (1, P*W*Cout) f32 folded BN bias
    # mdn/mup: (R, 1) f32 masks killing rolled rows that cross an image edge
    rows = x_ref.shape[0]
    x = x_ref[...].astype(jnp.float32)
    mask_dn = mdn_ref[...]           # 0.0 where r % H == 0     (no row above)
    mask_up = mup_ref[...]           # 0.0 where r % H == H - 1 (no row below)

    def conv_bn_silu(y, m_ref, b_ref):
        # 3x3 'same' conv: width taps folded into the banded matrices, the H
        # taps come from sublane rolls (XLU) + boundary masks (VPU).
        y_dn = pltpu.roll(y, 1, 0) * mask_dn          # y_dn[r] = y[r-1] (or 0)
        y_up = pltpu.roll(y, rows - 1, 0) * mask_up   # y_up[r] = y[r+1] (or 0)
        w_dtype = m_ref.dtype
        acc = jnp.dot(y_dn.astype(w_dtype), m_ref[0],
                      preferred_element_type=jnp.float32)
        acc += jnp.dot(y.astype(w_dtype), m_ref[1],
                       preferred_element_type=jnp.float32)
        acc += jnp.dot(y_up.astype(w_dtype), m_ref[2],
                       preferred_element_type=jnp.float32)
        z = acc + b_ref[...]                          # BN scale already in M
        # SiLU; approx reciprocal goes to the (idle) EUP instead of VPU divide.
        return z * pl.reciprocal(1.0 + jnp.exp(-z), approx=True)

    y1 = conv_bn_silu(x, m1_ref, b1_ref)              # (R, P*W*Cm)
    y2 = conv_bn_silu(y1, m2_ref, b2_ref)             # (R, P*W*C2)
    if add:
        y2 = y2 + x                                   # residual (C1 == C2)
    o_ref[...] = y2.astype(o_ref.dtype)


# --------------------------- wrapper / weight prep -------------------------- #

def _divisors(n):
    return [d for d in range(1, n + 1) if n % d == 0]


def _choose_lane_pack(batch, lane_width):
    """# images packed side-by-side on lanes so the row width reaches >= 128."""
    if lane_width >= 128:
        return 1
    good = [d for d in _divisors(batch) if d * lane_width >= 128]
    return min(good) if good else max(_divisors(batch))


def _choose_row_batch(groups, height, target_rows=256):
    """# lane-groups stacked on sublanes per grid step (~256 matmul rows)."""
    legal = [d for d in _divisors(groups) if (d * height) % 8 == 0 or d == groups]
    fit = [d for d in legal if d * height <= target_rows] or [min(legal)]
    bblk = max(fit)
    # Prefer >= 2 grid steps so both v7x TensorCores get fed.
    two_step = [d for d in fit if groups // d >= 2]
    if groups // bblk < 2 and two_step:
        bblk = max(two_step)
    return bblk


def _band_matrices(w, bn_scale, width, lane_pack, dtype=jnp.bfloat16):
    """Fold the width taps of a 3x3 'same' conv (+ BN scale) into banded mats.

    w: (cout, cin, 3, 3) OIHW.  Returns (3, lane_pack*W*cin, lane_pack*W*cout)
    with M[dh, v*cin+ci, u*cout+co] = bn_scale[co] * w[co, ci, dh, v-u+1]
    (zero outside 0 <= v-u+1 <= 2), block-diagonal over lane_pack images, so
      out_row[h] = sum_dh in_row[h+dh-1] @ M[dh]   (zero rows outside [0,H)).
    """
    cout, cin = w.shape[0], w.shape[1]
    w = (w * bn_scale[:, None, None, None]).astype(jnp.float32)
    wt = jnp.transpose(w, (2, 3, 1, 0))                   # (dh, dw, cin, cout)
    v = jnp.arange(width)[:, None]                        # input width index
    u = jnp.arange(width)[None, :]                        # output width index
    dw = v - u + 1                                        # width-tap index
    valid = (dw >= 0) & (dw <= 2)
    bands = wt[:, jnp.clip(dw, 0, 2), :, :]               # (3, W, W, cin, cout)
    bands = jnp.where(valid[None, :, :, None, None], bands, 0.0)
    bands = jnp.transpose(bands, (0, 1, 3, 2, 4)).reshape(
        3, width * cin, width * cout)
    if lane_pack > 1:       # block-diagonal: lane-packed images must not mix
        eye = jnp.eye(lane_pack, dtype=bands.dtype)
        bands = jnp.einsum("pq,dkn->dpkqn", eye, bands).reshape(
            3, lane_pack * width * cin, lane_pack * width * cout)
    return bands.astype(dtype)


def bottleneck_pallas(x, params, shortcut=True, eps=1e-5):
    """Forward of Bottleneck(c1, c2, shortcut, g=1, k=(3,3), e) on NCHW input."""
    # TODO(synk): grouped conv (g > 1) and kernel sizes other than 3x3 are not
    # implemented (the module defaults are g=1, k=(3,3)).
    w1, g1, beta1, mu1, var1, w2, g2, beta2, mu2, var2 = params
    B, C1, H, W = x.shape
    Cm, C2 = w1.shape[0], w2.shape[0]
    add = bool(shortcut) and (C1 == C2)

    # ---- tiling: lane-pack P images, stack Bblk lane-groups on sublanes ------
    P = _choose_lane_pack(B, W * C1)
    G = B // P                                            # lane-packed groups
    Bblk = _choose_row_batch(G, H)
    R = Bblk * H                                          # matmul rows / step
    K1, N1 = P * W * C1, P * W * Cm
    K2, N2 = P * W * Cm, P * W * C2

    # ---- one-time weight prep: BN folded, banded, block-diag, bf16 -----------
    s1 = g1 / jnp.sqrt(var1 + eps)
    s2 = g2 / jnp.sqrt(var2 + eps)
    M1 = _band_matrices(w1, s1, W, P)                     # (3, K1, N1) bf16
    M2 = _band_matrices(w2, s2, W, P)                     # (3, K2, N2) bf16
    # TODO(synk): at production feature-map sizes the banded matrices grow as
    # (W*C)^2 and outgrow v7x's 64 MiB VMEM; tile the W*Cout axis with an extra
    # "arbitrary" grid axis (+ accumulator) or switch to 9 Cin x Cout matmuls.
    b1f = jnp.tile((beta1 - mu1 * s1).astype(jnp.float32), W * P)[None, :]
    b2f = jnp.tile((beta2 - mu2 * s2).astype(jnp.float32), W * P)[None, :]

    # ---- image-boundary masks for the rolled H-neighbours ---------------------
    r = jnp.arange(R)
    mask_dn = ((r % H) != 0).astype(jnp.float32)[:, None]        # (R, 1)
    mask_up = ((r % H) != (H - 1)).astype(jnp.float32)[:, None]  # (R, 1)

    # ---- NCHW -> lane-dense rows: row = (g, h), lane = (p, w, c) --------------
    x_rows = (jnp.transpose(x, (0, 2, 3, 1))              # (B, H, W, C1)
              .reshape(G, P, H, W * C1)
              .transpose(0, 2, 1, 3)                      # (G, H, P, W*C1)
              .reshape(G * H, K1))

    kernel = functools.partial(_bottleneck_kernel, add=add)
    out_rows = pl.pallas_call(
        kernel,
        out_shape=jax.ShapeDtypeStruct((G * H, N2), x.dtype),
        grid=(G // Bblk,),
        in_specs=[
            pl.BlockSpec((R, K1), lambda i: (i, 0)),          # x rows
            pl.BlockSpec((3, K1, N1), lambda i: (0, 0, 0)),   # M1 (constant)
            pl.BlockSpec((1, N1), lambda i: (0, 0)),          # bias1
            pl.BlockSpec((3, K2, N2), lambda i: (0, 0, 0)),   # M2 (constant)
            pl.BlockSpec((1, N2), lambda i: (0, 0)),          # bias2
            pl.BlockSpec((R, 1), lambda i: (0, 0)),           # mask_dn
            pl.BlockSpec((R, 1), lambda i: (0, 0)),           # mask_up
        ],
        out_specs=pl.BlockSpec((R, N2), lambda i: (i, 0)),
        compiler_params=pltpu.CompilerParams(
            dimension_semantics=("parallel",)),
    )(x_rows, M1, b1f, M2, b2f, mask_dn, mask_up)

    # (G*H, P*W*C2) -> NCHW
    out = (out_rows.reshape(G, H, P, W, C2)
           .transpose(0, 2, 1, 3, 4)                      # (G, P, H, W, C2)
           .reshape(B, H, W, C2)
           .transpose(0, 3, 1, 2))
    return out


# ------------------------------ pure-JAX reference -------------------------- #

def bottleneck_ref(x, params, shortcut=True, eps=1e-5):
    w1, g1, beta1, mu1, var1, w2, g2, beta2, mu2, var2 = params

    def conv_bn_silu(z, w, gamma, beta, mu, var):
        y = jax.lax.conv_general_dilated(
            z, w, window_strides=(1, 1), padding="SAME",
            dimension_numbers=("NCHW", "OIHW", "NCHW"),
            precision=jax.lax.Precision.HIGHEST)
        s = gamma / jnp.sqrt(var + eps)
        y = y * s[None, :, None, None] + (beta - mu * s)[None, :, None, None]
        return y * jax.nn.sigmoid(y)

    y = conv_bn_silu(x, w1, g1, beta1, mu1, var1)
    y = conv_bn_silu(y, w2, g2, beta2, mu2, var2)
    add = bool(shortcut) and (x.shape[1] == w2.shape[0])
    return x + y if add else y


# ------------------------------------ test ---------------------------------- #

if __name__ == "__main__":
    key = jax.random.PRNGKey(0)
    B, C1, H, W = 2, 4, 16, 16        # Bottleneck(c1=4, c2=4, shortcut=True, e=0.5)
    C2 = 4
    Cm = int(C2 * 0.5)                # hidden channels c_

    ks = jax.random.split(key, 12)
    x = jax.random.normal(ks[0], (B, C1, H, W), dtype=jnp.float32)
    w1 = 0.2 * jax.random.normal(ks[1], (Cm, C1, 3, 3), dtype=jnp.float32)
    w2 = 0.2 * jax.random.normal(ks[2], (C2, Cm, 3, 3), dtype=jnp.float32)
    g1 = 1.0 + 0.1 * jax.random.normal(ks[3], (Cm,), dtype=jnp.float32)
    beta1 = 0.1 * jax.random.normal(ks[4], (Cm,), dtype=jnp.float32)
    mu1 = 0.1 * jax.random.normal(ks[5], (Cm,), dtype=jnp.float32)
    var1 = 1.0 + 0.1 * jax.random.uniform(ks[6], (Cm,), dtype=jnp.float32)
    g2 = 1.0 + 0.1 * jax.random.normal(ks[7], (C2,), dtype=jnp.float32)
    beta2 = 0.1 * jax.random.normal(ks[8], (C2,), dtype=jnp.float32)
    mu2 = 0.1 * jax.random.normal(ks[9], (C2,), dtype=jnp.float32)
    var2 = 1.0 + 0.1 * jax.random.uniform(ks[10], (C2,), dtype=jnp.float32)

    params = (w1, g1, beta1, mu1, var1, w2, g2, beta2, mu2, var2)

    out = bottleneck_pallas(x, params, shortcut=True)
    out = jax.block_until_ready(out)

    ref = bottleneck_ref(x, params, shortcut=True)
    assert out.shape == (B, C2, H, W)
    max_err = float(jnp.max(jnp.abs(out - ref)))
    # Tolerance is intentional: the kernel uses bf16 MXU operands (f32 accum)
    # and an approx-EUP sigmoid, vs. a Precision.HIGHEST f32 reference.
    assert jnp.allclose(out, ref, rtol=3e-2, atol=3e-2), f"mismatch, max err {max_err}"

    print("KERNEL_OK")
</pallas_src>

<mosaic_0001>
module attributes {stable_mosaic.version = 11 : i64} {
  func.func @_bottleneck_kernel(%arg0: i32, %arg1: memref<16x128xf32, #tpu.memory_space<vmem>>, %arg2: memref<3x128x64xbf16, #tpu.memory_space<vmem>>, %arg3: memref<1x64xf32, #tpu.memory_space<vmem>>, %arg4: memref<3x64x128xbf16, #tpu.memory_space<vmem>>, %arg5: memref<1x128xf32, #tpu.memory_space<vmem>>, %arg6: memref<16x1xf32, #tpu.memory_space<vmem>>, %arg7: memref<16x1xf32, #tpu.memory_space<vmem>>, %arg8: memref<16x128xf32, #tpu.memory_space<vmem>>) attributes {dimension_semantics = [#tpu.dimension_semantics<parallel>], iteration_bounds = array<i64: 1>, scalar_prefetch = 0 : i64, scratch_operands = 0 : i64, tpu.core_type = #tpu.core_type<tc>, window_params = [{transform_indices = @transform_0, window_bounds = array<i64: 16, 128>}, {pipeline_mode = #tpu.pipeline_mode<synchronous>, transform_indices = @transform_1, window_bounds = array<i64: 3, 128, 64>}, {pipeline_mode = #tpu.pipeline_mode<synchronous>, transform_indices = @transform_2, window_bounds = array<i64: 1, 64>}, {pipeline_mode = #tpu.pipeline_mode<synchronous>, transform_indices = @transform_3, window_bounds = array<i64: 3, 64, 128>}, {pipeline_mode = #tpu.pipeline_mode<synchronous>, transform_indices = @transform_4, window_bounds = array<i64: 1, 128>}, {pipeline_mode = #tpu.pipeline_mode<synchronous>, transform_indices = @transform_5, window_bounds = array<i64: 16, 1>}, {pipeline_mode = #tpu.pipeline_mode<synchronous>, transform_indices = @transform_6, window_bounds = array<i64: 16, 1>}, {transform_indices = @transform_7, window_bounds = array<i64: 16, 128>}]} {
    %c0 = arith.constant 0 : index
    %c0_0 = arith.constant 0 : index
    %0 = vector.load %arg1[%c0, %c0_0] : memref<16x128xf32, #tpu.memory_space<vmem>>, vector<16x128xf32>
    %c0_1 = arith.constant 0 : index
    %c0_2 = arith.constant 0 : index
    %1 = vector.load %arg6[%c0_1, %c0_2] : memref<16x1xf32, #tpu.memory_space<vmem>>, vector<16x1xf32>
    %c0_3 = arith.constant 0 : index
    %c0_4 = arith.constant 0 : index
    %2 = vector.load %arg7[%c0_3, %c0_4] : memref<16x1xf32, #tpu.memory_space<vmem>>, vector<16x1xf32>
    %c1_i32 = arith.constant 1 : i32
    %3 = tpu.dynamic_rotate %0 by %c1_i32 dim 0 : vector<16x128xf32>, i32 -> vector<16x128xf32>
    %4 = vector.broadcast %1 : vector<16x1xf32> to vector<16x128xf32>
    %5 = arith.mulf %3, %4 : vector<16x128xf32>
    %c15_i32 = arith.constant 15 : i32
    %6 = tpu.dynamic_rotate %0 by %c15_i32 dim 0 : vector<16x128xf32>, i32 -> vector<16x128xf32>
    %7 = vector.broadcast %2 : vector<16x1xf32> to vector<16x128xf32>
    %8 = arith.mulf %6, %7 : vector<16x128xf32>
    %9 = arith.truncf %5 : vector<16x128xf32> to vector<16x128xbf16>
    %c0_5 = arith.constant 0 : index
    %c0_6 = arith.constant 0 : index
    %c0_7 = arith.constant 0 : index
    %10 = vector.load %arg2[%c0_5, %c0_6, %c0_7] : memref<3x128x64xbf16, #tpu.memory_space<vmem>>, vector<1x128x64xbf16>
    %11 = vector.shape_cast %10 : vector<1x128x64xbf16> to vector<128x64xbf16>
    %cst = arith.constant dense<0.000000e+00> : vector<16x64xf32>
    %12 = tpu.matmul %9, %11, %cst {dimension_numbers = #tpu.dot_dimension_numbers<[1], [0], [0], [1], [0, 0, 1, 1], [], []>} : vector<16x128xbf16>, vector<128x64xbf16>, vector<16x64xf32> -> vector<16x64xf32>
    %13 = arith.truncf %0 : vector<16x128xf32> to vector<16x128xbf16>
    %c1 = arith.constant 1 : index
    %c0_8 = arith.constant 0 : index
    %c0_9 = arith.constant 0 : index
    %14 = vector.load %arg2[%c1, %c0_8, %c0_9] : memref<3x128x64xbf16, #tpu.memory_space<vmem>>, vector<1x128x64xbf16>
    %15 = vector.shape_cast %14 : vector<1x128x64xbf16> to vector<128x64xbf16>
    %cst_10 = arith.constant dense<0.000000e+00> : vector<16x64xf32>
    %16 = tpu.matmul %13, %15, %cst_10 {dimension_numbers = #tpu.dot_dimension_numbers<[1], [0], [0], [1], [0, 0, 1, 1], [], []>} : vector<16x128xbf16>, vector<128x64xbf16>, vector<16x64xf32> -> vector<16x64xf32>
    %17 = arith.addf %12, %16 : vector<16x64xf32>
    %18 = arith.truncf %8 : vector<16x128xf32> to vector<16x128xbf16>
    %c2 = arith.constant 2 : index
    %c0_11 = arith.constant 0 : index
    %c0_12 = arith.constant 0 : index
    %19 = vector.load %arg2[%c2, %c0_11, %c0_12] : memref<3x128x64xbf16, #tpu.memory_space<vmem>>, vector<1x128x64xbf16>
    %20 = vector.shape_cast %19 : vector<1x128x64xbf16> to vector<128x64xbf16>
    %cst_13 = arith.constant dense<0.000000e+00> : vector<16x64xf32>
    %21 = tpu.matmul %18, %20, %cst_13 {dimension_numbers = #tpu.dot_dimension_numbers<[1], [0], [0], [1], [0, 0, 1, 1], [], []>} : vector<16x128xbf16>, vector<128x64xbf16>, vector<16x64xf32> -> vector<16x64xf32>
    %22 = arith.addf %17, %21 : vector<16x64xf32>
    %c0_14 = arith.constant 0 : index
    %c0_15 = arith.constant 0 : index
    %23 = vector.load %arg3[%c0_14, %c0_15] : memref<1x64xf32, #tpu.memory_space<vmem>>, vector<1x64xf32>
    %24 = vector.broadcast %23 : vector<1x64xf32> to vector<16x64xf32>
    %25 = arith.addf %22, %24 : vector<16x64xf32>
    %cst_16 = arith.constant 0.000000e+00 : f32
    %26 = vector.broadcast %cst_16 : f32 to vector<16x64xf32>
    %27 = arith.subf %26, %25 : vector<16x64xf32>
    %28 = math.exp %27 : vector<16x64xf32>
    %cst_17 = arith.constant 1.000000e+00 : f32
    %29 = vector.broadcast %cst_17 : f32 to vector<16x64xf32>
    %30 = arith.addf %29, %28 : vector<16x64xf32>
    %31 = tpu.reciprocal %30 {approx = true} : vector<16x64xf32> -> vector<16x64xf32>
    %32 = arith.mulf %25, %31 : vector<16x64xf32>
    %c1_i32_18 = arith.constant 1 : i32
    %33 = tpu.dynamic_rotate %32 by %c1_i32_18 dim 0 : vector<16x64xf32>, i32 -> vector<16x64xf32>
    %34 = vector.broadcast %1 : vector<16x1xf32> to vector<16x64xf32>
    %35 = arith.mulf %33, %34 : vector<16x64xf32>
    %c15_i32_19 = arith.constant 15 : i32
    %36 = tpu.dynamic_rotate %32 by %c15_i32_19 dim 0 : vector<16x64xf32>, i32 -> vector<16x64xf32>
    %37 = vector.broadcast %2 : vector<16x1xf32> to vector<16x64xf32>
    %38 = arith.mulf %36, %37 : vector<16x64xf32>
    %39 = arith.truncf %35 : vector<16x64xf32> to vector<16x64xbf16>
    %c0_20 = arith.constant 0 : index
    %c0_21 = arith.constant 0 : index
    %c0_22 = arith.constant 0 : index
    %40 = vector.load %arg4[%c0_20, %c0_21, %c0_22] : memref<3x64x128xbf16, #tpu.memory_space<vmem>>, vector<1x64x128xbf16>
    %41 = vector.shape_cast %40 : vector<1x64x128xbf16> to vector<64x128xbf16>
    %cst_23 = arith.constant dense<0.000000e+00> : vector<16x128xf32>
    %42 = tpu.matmul %39, %41, %cst_23 {dimension_numbers = #tpu.dot_dimension_numbers<[1], [0], [0], [1], [0, 0, 1, 1], [], []>} : vector<16x64xbf16>, vector<64x128xbf16>, vector<16x128xf32> -> vector<16x128xf32>
    %43 = arith.truncf %32 : vector<16x64xf32> to vector<16x64xbf16>
    %c1_24 = arith.constant 1 : index
    %c0_25 = arith.constant 0 : index
    %c0_26 = arith.constant 0 : index
    %44 = vector.load %arg4[%c1_24, %c0_25, %c0_26] : memref<3x64x128xbf16, #tpu.memory_space<vmem>>, vector<1x64x128xbf16>
    %45 = vector.shape_cast %44 : vector<1x64x128xbf16> to vector<64x128xbf16>
    %cst_27 = arith.constant dense<0.000000e+00> : vector<16x128xf32>
    %46 = tpu.matmul %43, %45, %cst_27 {dimension_numbers = #tpu.dot_dimension_numbers<[1], [0], [0], [1], [0, 0, 1, 1], [], []>} : vector<16x64xbf16>, vector<64x128xbf16>, vector<16x128xf32> -> vector<16x128xf32>
    %47 = arith.addf %42, %46 : vector<16x128xf32>
    %48 = arith.truncf %38 : vector<16x64xf32> to vector<16x64xbf16>
    %c2_28 = arith.constant 2 : index
    %c0_29 = arith.constant 0 : index
    %c0_30 = arith.constant 0 : index
    %49 = vector.load %arg4[%c2_28, %c0_29, %c0_30] : memref<3x64x128xbf16, #tpu.memory_space<vmem>>, vector<1x64x128xbf16>
    %50 = vector.shape_cast %49 : vector<1x64x128xbf16> to vector<64x128xbf16>
    %cst_31 = arith.constant dense<0.000000e+00> : vector<16x128xf32>
    %51 = tpu.matmul %48, %50, %cst_31 {dimension_numbers = #tpu.dot_dimension_numbers<[1], [0], [0], [1], [0, 0, 1, 1], [], []>} : vector<16x64xbf16>, vector<64x128xbf16>, vector<16x128xf32> -> vector<16x128xf32>
    %52 = arith.addf %47, %51 : vector<16x128xf32>
    %c0_32 = arith.constant 0 : index
    %c0_33 = arith.constant 0 : index
    %53 = vector.load %arg5[%c0_32, %c0_33] : memref<1x128xf32, #tpu.memory_space<vmem>>, vector<1x128xf32>
    %54 = vector.broadcast %53 : vector<1x128xf32> to vector<16x128xf32>
    %55 = arith.addf %52, %54 : vector<16x128xf32>
    %cst_34 = arith.constant 0.000000e+00 : f32
    %56 = vector.broadcast %cst_34 : f32 to vector<16x128xf32>
    %57 = arith.subf %56, %55 : vector<16x128xf32>
    %58 = math.exp %57 : vector<16x128xf32>
    %cst_35 = arith.constant 1.000000e+00 : f32
    %59 = vector.broadcast %cst_35 : f32 to vector<16x128xf32>
    %60 = arith.addf %59, %58 : vector<16x128xf32>
    %61 = tpu.reciprocal %60 {approx = true} : vector<16x128xf32> -> vector<16x128xf32>
    %62 = arith.mulf %55, %61 : vector<16x128xf32>
    %63 = arith.addf %62, %0 : vector<16x128xf32>
    %c0_36 = arith.constant 0 : index
    %c0_37 = arith.constant 0 : index
    %64 = vector.load %arg8[%c0_36, %c0_37] : memref<16x128xf32, #tpu.memory_space<vmem>>, vector<16x128xf32>
    tpu.vector_store %arg8[%c0_36, %c0_37], %63 {strides = array<i32>} : memref<16x128xf32, #tpu.memory_space<vmem>>, vector<16x128xf32>,
    return
  }
  func.func @transform_0(%arg0: i32) -> (i32, i32) {
    %c0_i32 = arith.constant 0 : i32
    %c0_i32_0 = arith.constant 0 : i32
    return %arg0, %c0_i32 : i32, i32
  }
  func.func @transform_1(%arg0: i32) -> (i32, i32, i32) {
    %c0_i32 = arith.constant 0 : i32
    %c0_i32_0 = arith.constant 0 : i32
    %c0_i32_1 = arith.constant 0 : i32
    %c0_i32_2 = arith.constant 0 : i32
    return %c0_i32, %c0_i32_0, %c0_i32_1 : i32, i32, i32
  }
  func.func @transform_2(%arg0: i32) -> (i32, i32) {
    %c0_i32 = arith.constant 0 : i32
    %c0_i32_0 = arith.constant 0 : i32
    %c0_i32_1 = arith.constant 0 : i32
    return %c0_i32, %c0_i32_0 : i32, i32
  }
  func.func @transform_3(%arg0: i32) -> (i32, i32, i32) {
    %c0_i32 = arith.constant 0 : i32
    %c0_i32_0 = arith.constant 0 : i32
    %c0_i32_1 = arith.constant 0 : i32
    %c0_i32_2 = arith.constant 0 : i32
    return %c0_i32, %c0_i32_0, %c0_i32_1 : i32, i32, i32
  }
  func.func @transform_4(%arg0: i32) -> (i32, i32) {
    %c0_i32 = arith.constant 0 : i32
    %c0_i32_0 = arith.constant 0 : i32
    %c0_i32_1 = arith.constant 0 : i32
    return %c0_i32, %c0_i32_0 : i32, i32
  }
  func.func @transform_5(%arg0: i32) -> (i32, i32) {
    %c0_i32 = arith.constant 0 : i32
    %c0_i32_0 = arith.constant 0 : i32
    %c0_i32_1 = arith.constant 0 : i32
    return %c0_i32, %c0_i32_0 : i32, i32
  }
  func.func @transform_6(%arg0: i32) -> (i32, i32) {
    %c0_i32 = arith.constant 0 : i32
    %c0_i32_0 = arith.constant 0 : i32
    %c0_i32_1 = arith.constant 0 : i32
    return %c0_i32, %c0_i32_0 : i32, i32
  }
  func.func @transform_7(%arg0: i32) -> (i32, i32) {
    %c0_i32 = arith.constant 0 : i32
    %c0_i32_0 = arith.constant 0 : i32
    return %arg0, %c0_i32 : i32, i32
  }
}

</mosaic_0001>

<llo_original>
// kernel: tpu_custom_call.1
$region0: #{tpu_custom_call.1}
  #allocation0 [shape = 'u32[]', space=smem, size = 0x4, offset = 0x4, fixed_abs, tag = 'smem constant byte address 0x4 - core index']
  #allocation1 [shape = 'u32[72,128]{1,0:T(1,128)}', space=vmem, size = 0x9000, scoped, tag = 'internal scratch']
  %s0 = inlined_call_operand.vmem [shape: f32[16,128], index: 0, kind: input, shape index: {}]
  %s1 = inlined_call_operand.vmem [shape: bf16[3,128,64], index: 1, kind: input, shape index: {}]
  %s2 = inlined_call_operand.vmem [shape: f32[1,64], index: 2, kind: input, shape index: {}]
  %s3 = inlined_call_operand.vmem [shape: bf16[3,64,128], index: 3, kind: input, shape index: {}]
  %s4 = inlined_call_operand.vmem [shape: f32[1,128], index: 4, kind: input, shape index: {}]
  %s5 = inlined_call_operand.vmem [shape: f32[16,1], index: 5, kind: input, shape index: {}]
  %s6 = inlined_call_operand.vmem [shape: f32[16,1], index: 6, kind: input, shape index: {}]
  %s7 = inlined_call_operand.hbm [shape: f32[16,128], index: 7, kind: output, shape index: {}]
  %s8 = sld [smem:[#allocation0]]
  $region38: #{tpu_custom_call.1} parent=0
    _
  %s10 = ssub.s32 1, %s8
  %s11 = scalar_select 0, %s10, %s8
  $region1: #{tpu_custom_call.1} parent=0
    #allocation2 [shape = 'u8[8192]{0}', space=vmem, size = 0x2000, scoped, tag = 'output window, operand 0, single buffered']
    #allocation3 [shape = 's32[1]{0}', space=sflag, size = 0x4, scoped, tag = 'scoped memory for tpu_custom_call.1']
    %12 = vsyncpa [#allocation3], 0
    // Predicated region
    $region2: #{tpu_custom_call.1} parent=1 // pred_check
      _
    $region3: #{tpu_custom_call.1} parent=1 // pred_check_branch
      %14 = sbr.rel (0) target = $region5
    $region4: #{tpu_custom_call.1} parent=1 // pred_region
      _
    $region5: #{tpu_custom_call.1} parent=1 // pred_fallthru
      _
    // Predicated region
    $region6: #{tpu_custom_call.1} parent=1 // pred_check
      _
    $region7: #{tpu_custom_call.1} parent=1 // pred_check_branch
      %16 = sbr.rel (0) target = $region9
    $region8: #{tpu_custom_call.1} parent=1 // pred_region
      _
    $region9: #{tpu_custom_call.1} parent=1 // pred_fallthru
      _
    // Predicated region
    $region10: #{tpu_custom_call.1} parent=1 // pred_check
      _
    $region11: #{tpu_custom_call.1} parent=1 // pred_check_branch
      %18 = sbr.rel (0) target = $region13
    $region12: #{tpu_custom_call.1} parent=1 // pred_region
      _
    $region13: #{tpu_custom_call.1} parent=1 // pred_fallthru
      _
    // Predicated region
    $region14: #{tpu_custom_call.1} parent=1 // pred_check
      _
    $region15: #{tpu_custom_call.1} parent=1 // pred_check_branch
      %20 = sbr.rel (0) target = $region17
    $region16: #{tpu_custom_call.1} parent=1 // pred_region
      _
    $region17: #{tpu_custom_call.1} parent=1 // pred_fallthru
      _
    // Predicated region
    $region18: #{tpu_custom_call.1} parent=1 // pred_check
      _
    $region19: #{tpu_custom_call.1} parent=1 // pred_check_branch
      %22 = sbr.rel (0) target = $region21
    $region20: #{tpu_custom_call.1} parent=1 // pred_region
      _
    $region21: #{tpu_custom_call.1} parent=1 // pred_fallthru
      _
    // Predicated region
    $region22: #{tpu_custom_call.1} parent=1 // pred_check
      _
    $region23: #{tpu_custom_call.1} parent=1 // pred_check_branch
      %24 = sbr.rel (0) target = $region25
    $region24: #{tpu_custom_call.1} parent=1 // pred_region
      _
    $region25: #{tpu_custom_call.1} parent=1 // pred_fallthru
      _
    // Predicated region
    $region26: #{tpu_custom_call.1} parent=1 // pred_check
      _
    $region27: #{tpu_custom_call.1} parent=1 // pred_check_branch
      %26 = sbr.rel (0) target = $region29
    $region28: #{tpu_custom_call.1} parent=1 // pred_region
      _
    $region29: #{tpu_custom_call.1} parent=1 // pred_fallthru
      _
    %v28 = vld [vmem:[%s0] sm:$0xff]
    %v29 = vld [vmem:[%s0 + $0x8] sm:$0xff]
    %v30 = vld [vmem:[%s5] sm:$0xff]
    %v31 = vld [vmem:[%s5 + $0x8] sm:$0xff]
    %v32 = vld [vmem:[%s6] sm:$0xff]
    %v33 = vld [vmem:[%s6 + $0x8] sm:$0xff]
    %v34 = vrot.slane %v28, 7
    %v35 = vrot.slane %v29, 7
    %v36 = vlaneseq
    %v37 = vshrl.u32 %v36, 7
    %vm38 = vcmp.lt.s32.totalorder %v37, 1
    %v39 = vsel %vm38, %v34, %v35
    %v40 = vsel %vm38, %v35, %v34
    %42 = vset.pattern.permute.xlu0 0
    %43 = vperm.xlu0 %42, %v30
    %v44 = vpop.permute.xlu0 %43
    %47 = vset.pattern.permute.xlu0 0
    %48 = vperm.xlu0 %47, %v31
    %v49 = vpop.permute.xlu0 %48
    %v51 = vmul.f32 %v40, %v44
    %v52 = vmul.f32 %v39, %v49
    %v53 = vrot.slane %v28, 1
    %v54 = vrot.slane %v29, 1
    %vm55 = vcmp.lt.s32.totalorder %v37, 7
    %v56 = vsel %vm55, %v53, %v54
    %v57 = vsel %vm55, %v54, %v53
    %59 = vset.pattern.permute.xlu0 0
    %60 = vperm.xlu0 %59, %v32
    %v61 = vpop.permute.xlu0 %60
    %64 = vset.pattern.permute.xlu0 0
    %65 = vperm.xlu0 %64, %v33
    %v66 = vpop.permute.xlu0 %65
    %v68 = vmul.f32 %v56, %v61
    %v69 = vmul.f32 %v57, %v66
    %v70 = vpack.c.bf16 %v52, %v51
    %v71 = vld [vmem:[%s1] sm:$0xf]
    %v72 = vld [vmem:[%s1 + $0x4] sm:$0xf]
    %v73 = vld [vmem:[%s1 + $0x8] sm:$0xf]
    %v74 = vld [vmem:[%s1 + $0xc] sm:$0xf]
    %v75 = vld [vmem:[%s1 + $0x10] sm:$0xf]
    %v76 = vld [vmem:[%s1 + $0x14] sm:$0xf]
    %v77 = vld [vmem:[%s1 + $0x18] sm:$0xf]
    %v78 = vld [vmem:[%s1 + $0x1c] sm:$0xf]
    %v79 = vld [vmem:[%s1 + $0x20] sm:$0xf]
    %v80 = vld [vmem:[%s1 + $0x24] sm:$0xf]
    %v81 = vld [vmem:[%s1 + $0x28] sm:$0xf]
    %v82 = vld [vmem:[%s1 + $0x2c] sm:$0xf]
    %v83 = vld [vmem:[%s1 + $0x30] sm:$0xf]
    %v84 = vld [vmem:[%s1 + $0x34] sm:$0xf]
    %v85 = vld [vmem:[%s1 + $0x38] sm:$0xf]
    %v86 = vld [vmem:[%s1 + $0x3c] sm:$0xf]
    %v87 = vpack.c.bf16 %v29, %v28
    %s88 = scalar_lea.vmem %s1, 64
    %v89 = vld [vmem:[%s88] sm:$0xf]
    %v90 = vld [vmem:[%s88 + $0x4] sm:$0xf]
    %v91 = vld [vmem:[%s88 + $0x8] sm:$0xf]
    %v92 = vld [vmem:[%s88 + $0xc] sm:$0xf]
    %v93 = vld [vmem:[%s88 + $0x10] sm:$0xf]
    %v94 = vld [vmem:[%s88 + $0x14] sm:$0xf]
    %v95 = vld [vmem:[%s88 + $0x18] sm:$0xf]
    %v96 = vld [vmem:[%s88 + $0x1c] sm:$0xf]
    %v97 = vld [vmem:[%s88 + $0x20] sm:$0xf]
    %v98 = vld [vmem:[%s88 + $0x24] sm:$0xf]
    %v99 = vld [vmem:[%s88 + $0x28] sm:$0xf]
    %v100 = vld [vmem:[%s88 + $0x2c] sm:$0xf]
    %v101 = vld [vmem:[%s88 + $0x30] sm:$0xf]
    %v102 = vld [vmem:[%s88 + $0x34] sm:$0xf]
    %v103 = vld [vmem:[%s88 + $0x38] sm:$0xf]
    %v104 = vld [vmem:[%s88 + $0x3c] sm:$0xf]
    %v121 = vunpack.c.l.b16 %v89
    %v122 = vunpack.c.l.b16 %v90
    %v123 = vunpack.c.l.b16 %v91
    %v124 = vunpack.c.l.b16 %v92
    %v125 = vunpack.c.l.b16 %v93
    %v126 = vunpack.c.l.b16 %v94
    %v127 = vunpack.c.l.b16 %v95
    %v128 = vunpack.c.l.b16 %v96
    %v129 = vunpack.c.l.b16 %v97
    %v130 = vunpack.c.l.b16 %v98
    %v131 = vunpack.c.l.b16 %v99
    %v132 = vunpack.c.l.b16 %v100
    %v133 = vunpack.c.l.b16 %v101
    %v134 = vunpack.c.l.b16 %v102
    %v135 = vunpack.c.l.b16 %v103
    %v136 = vunpack.c.l.b16 %v104
    %v137 = vpack.c.b16 %v122, %v121
    %v138 = vpack.c.b16 %v124, %v123
    %v139 = vpack.c.b16 %v126, %v125
    %v140 = vpack.c.b16 %v128, %v127
    %v141 = vpack.c.b16 %v130, %v129
    %v142 = vpack.c.b16 %v132, %v131
    %v143 = vpack.c.b16 %v134, %v133
    %v144 = vpack.c.b16 %v136, %v135
    %153 = vmatpush.bf16.msra.mxu0 %v144
    %154 = vmatpush.bf16.msra.mxu0 %v143
    %155 = vmatpush.bf16.msra.mxu0 %v142
    %156 = vmatpush.bf16.msra.mxu0 %v141
    %157 = vmatpush.bf16.msra.mxu0 %v140
    %158 = vmatpush.bf16.msra.mxu0 %v139
    %159 = vmatpush.bf16.msra.mxu0 %v138
    %160 = vmatpush.bf16.msra.mxu0 %v137
    %161 = vmatmul.bf16.gmra.mxu0 %v87
    %v162 = vpop.f32.mrf.mxu0
    %v163 = vadd.f32 0.0, %v162
    %v164 = vpop.f32.mrf.mxu0
    %v165 = vadd.f32 0.0, %v164
    %166 = vdwg.mxu0
    %v183 = vunpack.c.l.b16 %v71
    %v184 = vunpack.c.l.b16 %v72
    %v185 = vunpack.c.l.b16 %v73
    %v186 = vunpack.c.l.b16 %v74
    %v187 = vunpack.c.l.b16 %v75
    %v188 = vunpack.c.l.b16 %v76
    %v189 = vunpack.c.l.b16 %v77
    %v190 = vunpack.c.l.b16 %v78
    %v191 = vunpack.c.l.b16 %v79
    %v192 = vunpack.c.l.b16 %v80
    %v193 = vunpack.c.l.b16 %v81
    %v194 = vunpack.c.l.b16 %v82
    %v195 = vunpack.c.l.b16 %v83
    %v196 = vunpack.c.l.b16 %v84
    %v197 = vunpack.c.l.b16 %v85
    %v198 = vunpack.c.l.b16 %v86
    %v199 = vpack.c.b16 %v184, %v183
    %v200 = vpack.c.b16 %v186, %v185
    %v201 = vpack.c.b16 %v188, %v187
    %v202 = vpack.c.b16 %v190, %v189
    %v203 = vpack.c.b16 %v192, %v191
    %v204 = vpack.c.b16 %v194, %v193
    %v205 = vpack.c.b16 %v196, %v195
    %v206 = vpack.c.b16 %v198, %v197
    %215 = vmatpush.bf16.msra.mxu0 %v206
    %216 = vmatpush.bf16.msra.mxu0 %v205
    %217 = vmatpush.bf16.msra.mxu0 %v204
    %218 = vmatpush.bf16.msra.mxu0 %v203
    %219 = vmatpush.bf16.msra.mxu0 %v202
    %220 = vmatpush.bf16.msra.mxu0 %v201
    %221 = vmatpush.bf16.msra.mxu0 %v200
    %222 = vmatpush.bf16.msra.mxu0 %v199
    %223 = vmatmul.bf16.gmra.mxu0 %v70
    %v224 = vpop.f32.mrf.mxu0
    %v225 = vadd.f32 %v163, %v224
    %v226 = vpop.f32.mrf.mxu0
    %v227 = vadd.f32 %v165, %v226
    %228 = vdwg.mxu0
    %v229 = vpack.c.bf16 %v69, %v68
    %s230 = scalar_lea.vmem %s1, 128
    %v231 = vld [vmem:[%s230] sm:$0xf]
    %v232 = vld [vmem:[%s230 + $0x4] sm:$0xf]
    %v233 = vld [vmem:[%s230 + $0x8] sm:$0xf]
    %v234 = vld [vmem:[%s230 + $0xc] sm:$0xf]
    %v235 = vld [vmem:[%s230 + $0x10] sm:$0xf]
    %v236 = vld [vmem:[%s230 + $0x14] sm:$0xf]
    %v237 = vld [vmem:[%s230 + $0x18] sm:$0xf]
    %v238 = vld [vmem:[%s230 + $0x1c] sm:$0xf]
    %v239 = vld [vmem:[%s230 + $0x20] sm:$0xf]
    %v240 = vld [vmem:[%s230 + $0x24] sm:$0xf]
    %v241 = vld [vmem:[%s230 + $0x28] sm:$0xf]
    %v242 = vld [vmem:[%s230 + $0x2c] sm:$0xf]
    %v243 = vld [vmem:[%s230 + $0x30] sm:$0xf]
    %v244 = vld [vmem:[%s230 + $0x34] sm:$0xf]
    %v245 = vld [vmem:[%s230 + $0x38] sm:$0xf]
    %v246 = vld [vmem:[%s230 + $0x3c] sm:$0xf]
    %v263 = vunpack.c.l.b16 %v231
    %v264 = vunpack.c.l.b16 %v232
    %v265 = vunpack.c.l.b16 %v233
    %v266 = vunpack.c.l.b16 %v234
    %v267 = vunpack.c.l.b16 %v235
    %v268 = vunpack.c.l.b16 %v236
    %v269 = vunpack.c.l.b16 %v237
    %v270 = vunpack.c.l.b16 %v238
    %v271 = vunpack.c.l.b16 %v239
    %v272 = vunpack.c.l.b16 %v240
    %v273 = vunpack.c.l.b16 %v241
    %v274 = vunpack.c.l.b16 %v242
    %v275 = vunpack.c.l.b16 %v243
    %v276 = vunpack.c.l.b16 %v244
    %v277 = vunpack.c.l.b16 %v245
    %v278 = vunpack.c.l.b16 %v246
    %v279 = vpack.c.b16 %v264, %v263
    %v280 = vpack.c.b16 %v266, %v265
    %v281 = vpack.c.b16 %v268, %v267
    %v282 = vpack.c.b16 %v270, %v269
    %v283 = vpack.c.b16 %v272, %v271
    %v284 = vpack.c.b16 %v274, %v273
    %v285 = vpack.c.b16 %v276, %v275
    %v286 = vpack.c.b16 %v278, %v277
    %295 = vmatpush.bf16.msra.mxu0 %v286
    %296 = vmatpush.bf16.msra.mxu0 %v285
    %297 = vmatpush.bf16.msra.mxu0 %v284
    %298 = vmatpush.bf16.msra.mxu0 %v283
    %299 = vmatpush.bf16.msra.mxu0 %v282
    %300 = vmatpush.bf16.msra.mxu0 %v281
    %301 = vmatpush.bf16.msra.mxu0 %v280
    %302 = vmatpush.bf16.msra.mxu0 %v279
    %303 = vmatmul.bf16.gmra.mxu0 %v229
    %v304 = vpop.f32.mrf.mxu0
    %v305 = vadd.f32 0.0, %v304
    %v306 = vpop.f32.mrf.mxu0
    %v307 = vadd.f32 0.0, %v306
    %308 = vdwg.mxu0
    %v309 = vadd.f32 %v225, %v305
    %v310 = vadd.f32 %v227, %v307
    %v311 = vld [vmem:[%s2] sm:$0x1]
    %v313 = vperm.slane %v311, 0
    %v315 = vadd.f32 %v309, %v313
    %v316 = vadd.f32 %v310, %v313
    %v317 = vsub.f32 0.0, %v315
    %v318 = vsub.f32 0.0, %v316
    %v319 = vmul.f32 %v317, 1.442695
    %v320 = vpow.pop %v319
    %v321 = vmul.f32 %v318, 1.442695
    %v322 = vpow.pop %v321
    %v323 = vadd.f32 %v320, 1.0
    %v324 = vadd.f32 %v322, 1.0
    %v325 = vrcp.pop %v323
    %v326 = vrcp.pop %v324
    %v327 = vmul.f32 %v315, %v325
    %v328 = vmul.f32 %v316, %v326
    %v329 = vrot.slane %v327, 7
    %v330 = vrot.slane %v328, 7
    %v331 = vsel %vm38, %v329, %v330
    %v332 = vsel %vm38, %v330, %v329
    %v333 = vmul.f32 %v332, %v44
    %v334 = vmul.f32 %v331, %v49
    %v335 = vrot.slane %v327, 1
    %v336 = vrot.slane %v328, 1
    %v337 = vsel %vm55, %v335, %v336
    %v338 = vsel %vm55, %v336, %v335
    %v339 = vmul.f32 %v337, %v61
    %v340 = vmul.f32 %v338, %v66
    %v341 = vpack.c.bf16 %v334, %v333
    %v342 = vld [vmem:[%s3] sm:$0xf]
    %v343 = vld [vmem:[%s3 + $0x4] sm:$0xf]
    %v344 = vld [vmem:[%s3 + $0x8] sm:$0xf]
    %v345 = vld [vmem:[%s3 + $0xc] sm:$0xf]
    %v346 = vld [vmem:[%s3 + $0x10] sm:$0xf]
    %v347 = vld [vmem:[%s3 + $0x14] sm:$0xf]
    %v348 = vld [vmem:[%s3 + $0x18] sm:$0xf]
    %v349 = vld [vmem:[%s3 + $0x1c] sm:$0xf]
    %v350 = vpack.c.bf16 %v328, %v327
    %s351 = scalar_lea.vmem %s3, 32
    %v352 = vld [vmem:[%s351] sm:$0xf]
    %v353 = vld [vmem:[%s351 + $0x4] sm:$0xf]
    %v354 = vld [vmem:[%s351 + $0x8] sm:$0xf]
    %v355 = vld [vmem:[%s351 + $0xc] sm:$0xf]
    %v356 = vld [vmem:[%s351 + $0x10] sm:$0xf]
    %v357 = vld [vmem:[%s351 + $0x14] sm:$0xf]
    %v358 = vld [vmem:[%s351 + $0x18] sm:$0xf]
    %v359 = vld [vmem:[%s351 + $0x1c] sm:$0xf]
    %v368 = vunpack.c.l.b16 %v352
    %v369 = vunpack.c.l.b16 %v353
    %v370 = vunpack.c.l.b16 %v354
    %v371 = vunpack.c.l.b16 %v355
    %v372 = vunpack.c.l.b16 %v356
    %v373 = vunpack.c.l.b16 %v357
    %v374 = vunpack.c.l.b16 %v358
    %v375 = vunpack.c.l.b16 %v359
    %v376 = vpack.c.b16 %v369, %v368
    %v377 = vpack.c.b16 %v371, %v370
    %v378 = vpack.c.b16 %v373, %v372
    %v379 = vpack.c.b16 %v375, %v374
    %vm384 = vcmask 523264
    %v386 = vsel %vm384, %v350, 0
    %388 = vmatpush.bf16.msra.mxu0 0
    %389 = vmatpush.bf16.msra.mxu0 0
    %390 = vmatpush.bf16.msra.mxu0 0
    %391 = vmatpush.bf16.msra.mxu0 0
    %392 = vmatpush.bf16.msra.mxu0 %v379
    %393 = vmatpush.bf16.msra.mxu0 %v378
    %394 = vmatpush.bf16.msra.mxu0 %v377
    %395 = vmatpush.bf16.msra.mxu0 %v376
    %396 = vmatmul.bf16.gmra.mxu0 %v386
    %v397 = vpop.f32.mrf.mxu0
    %v398 = vadd.f32 0.0, %v397
    %v399 = vpop.f32.mrf.mxu0
    %v400 = vadd.f32 0.0, %v399
    %401 = vdwg.mxu0
    %v410 = vunpack.c.l.b16 %v342
    %v411 = vunpack.c.l.b16 %v343
    %v412 = vunpack.c.l.b16 %v344
    %v413 = vunpack.c.l.b16 %v345
    %v414 = vunpack.c.l.b16 %v346
    %v415 = vunpack.c.l.b16 %v347
    %v416 = vunpack.c.l.b16 %v348
    %v417 = vunpack.c.l.b16 %v349
    %v418 = vpack.c.b16 %v411, %v410
    %v419 = vpack.c.b16 %v413, %v412
    %v420 = vpack.c.b16 %v415, %v414
    %v421 = vpack.c.b16 %v417, %v416
    %v427 = vsel %vm384, %v341, 0
    %429 = vmatpush.bf16.msra.mxu0 0
    %430 = vmatpush.bf16.msra.mxu0 0
    %431 = vmatpush.bf16.msra.mxu0 0
    %432 = vmatpush.bf16.msra.mxu0 0
    %433 = vmatpush.bf16.msra.mxu0 %v421
    %434 = vmatpush.bf16.msra.mxu0 %v420
    %435 = vmatpush.bf16.msra.mxu0 %v419
    %436 = vmatpush.bf16.msra.mxu0 %v418
    %437 = vmatmul.bf16.gmra.mxu0 %v427
    %v438 = vpop.f32.mrf.mxu0
    %v439 = vadd.f32 %v398, %v438
    %v440 = vpop.f32.mrf.mxu0
    %v441 = vadd.f32 %v400, %v440
    %442 = vdwg.mxu0
    %v443 = vpack.c.bf16 %v340, %v339
    %s444 = scalar_lea.vmem %s3, 64
    %v445 = vld [vmem:[%s444] sm:$0xf]
    %v446 = vld [vmem:[%s444 + $0x4] sm:$0xf]
    %v447 = vld [vmem:[%s444 + $0x8] sm:$0xf]
    %v448 = vld [vmem:[%s444 + $0xc] sm:$0xf]
    %v449 = vld [vmem:[%s444 + $0x10] sm:$0xf]
    %v450 = vld [vmem:[%s444 + $0x14] sm:$0xf]
    %v451 = vld [vmem:[%s444 + $0x18] sm:$0xf]
    %v452 = vld [vmem:[%s444 + $0x1c] sm:$0xf]
    %v461 = vunpack.c.l.b16 %v445
    %v462 = vunpack.c.l.b16 %v446
    %v463 = vunpack.c.l.b16 %v447
    %v464 = vunpack.c.l.b16 %v448
    %v465 = vunpack.c.l.b16 %v449
    %v466 = vunpack.c.l.b16 %v450
    %v467 = vunpack.c.l.b16 %v451
    %v468 = vunpack.c.l.b16 %v452
    %v469 = vpack.c.b16 %v462, %v461
    %v470 = vpack.c.b16 %v464, %v463
    %v471 = vpack.c.b16 %v466, %v465
    %v472 = vpack.c.b16 %v468, %v467
    %v478 = vsel %vm384, %v443, 0
    %480 = vmatpush.bf16.msra.mxu0 0
    %481 = vmatpush.bf16.msra.mxu0 0
    %482 = vmatpush.bf16.msra.mxu0 0
    %483 = vmatpush.bf16.msra.mxu0 0
    %484 = vmatpush.bf16.msra.mxu0 %v472
    %485 = vmatpush.bf16.msra.mxu0 %v471
    %486 = vmatpush.bf16.msra.mxu0 %v470
    %487 = vmatpush.bf16.msra.mxu0 %v469
    %488 = vmatmul.bf16.gmra.mxu0 %v478
    %v489 = vpop.f32.mrf.mxu0
    %v490 = vadd.f32 0.0, %v489
    %v491 = vpop.f32.mrf.mxu0
    %v492 = vadd.f32 0.0, %v491
    %493 = vdwg.mxu0
    %v494 = vadd.f32 %v439, %v490
    %v495 = vadd.f32 %v441, %v492
    %v496 = vld [vmem:[%s4] sm:$0x1]
    %v498 = vperm.slane %v496, 0
    %v500 = vadd.f32 %v494, %v498
    %v501 = vadd.f32 %v495, %v498
    %v502 = vsub.f32 0.0, %v500
    %v503 = vsub.f32 0.0, %v501
    %v504 = vmul.f32 %v502, 1.442695
    %v505 = vpow.pop %v504
    %v506 = vmul.f32 %v503, 1.442695
    %v507 = vpow.pop %v506
    %v508 = vadd.f32 %v505, 1.0
    %v509 = vadd.f32 %v507, 1.0
    %v510 = vrcp.pop %v508
    %v511 = vrcp.pop %v509
    %v512 = vmul.f32 %v500, %v510
    %v513 = vmul.f32 %v501, %v511
    %v514 = vadd.f32 %v512, %v28
    %v515 = vadd.f32 %v513, %v29
    %516 = vst [vmem:[#allocation2] sm:$0xff] %v514
    %517 = vst [vmem:[#allocation2 + $0x8] sm:$0xff] %v515
    // Predicated region
    $region30: #{tpu_custom_call.1} parent=1 // pred_check
      _
    $region31: #{tpu_custom_call.1} parent=1 // pred_check_branch
      %519 = sbr.rel (0) target = $region33
    $region32: #{tpu_custom_call.1} parent=1 // pred_region
      %521 = vsyncadd [#allocation3], 0
      %s522 = sshll.u32 [#allocation2], 4
      %s523 = int_to_ptr.vmem [resolvable:$true] %s522
      %s524 = sshll.u32 %s7, 4
      %s525 = int_to_ptr.hbm [resolvable:$true] %s524
      %530 = dma.vmem_to_hbm [thread:$0]  %s523, 256, %s525, [#allocation3], 128, 128, 8
    $region33: #{tpu_custom_call.1} parent=1 // pred_fallthru
      _
    // Predicated region
    $region34: #{tpu_custom_call.1} parent=1 // pred_check
      _
    $region35: #{tpu_custom_call.1} parent=1 // pred_check_branch
      %532 = sbr.rel (0) target = $region37
    $region36: #{tpu_custom_call.1} parent=1 // pred_region
      %534 = dma.done [#allocation3], 256
    $region37: #{tpu_custom_call.1} parent=1 // pred_fallthru
      _
    %535 = vsyncpa [#allocation3], 1

</llo_original>
